<compile_context>
chip_gen: v5e
topology: v5e:2x2
jax: 0.10.0
libtpu: 0.0.40
codegen_flags: <defaults>
</compile_context>

<pallas_src>
import functools

import jax
import jax.numpy as jnp
import numpy as np
from jax import lax
from jax.experimental import pallas as pl
from jax.experimental.pallas import tpu as pltpu

_SUBLANE = 8
_LANE = 128


def _lstm_fc_kernel(x_ref, wih_ref, whh_ref, b_ref, wfc_ref, bfc_ref, out_ref):
    """Single-invocation LSTM recurrence + fused final Linear.

    x_ref   : (T*Bp, D)  f32, time-major, batch padded to Bp (multiple of 8)
    wih_ref : (D, 4H)    bf16, gate columns ordered [i | f | o | g]
    whh_ref : (H, 4H)    f32,  gate columns ordered [i | f | o | g]
    b_ref   : (1, 4H)    f32,  b_ih + b_hh, same column order
    wfc_ref : (H, Cp)    f32,  FC weight transposed, padded to Cp lanes
    bfc_ref : (1, Cp)    f32,  FC bias, padded
    out_ref : (Bp, Cp)   f32,  lane-dense output tile
    """
    TB, _ = x_ref.shape
    Bp, _ = out_ref.shape
    H4 = whh_ref.shape[1]
    H = H4 // 4
    T = TB // Bp

    # ---- hoisted, non-recurrent input projection: one bf16 MXU call --------
    gx = (jnp.dot(x_ref[...].astype(jnp.bfloat16), wih_ref[...],
                  preferred_element_type=jnp.float32)
          + b_ref[...])                                      # (T*Bp, 4H) f32, vregs

    whh = whh_ref[...]                                       # (H, 4H), resident

    # Precomputed column mask for the [o | g] half: sigmoid lanes < H, tanh after.
    col = lax.broadcasted_iota(jnp.int32, (Bp, 2 * H), 1)
    og_is_sig = col < H

    h = jnp.zeros((Bp, H), jnp.float32)
    c = jnp.zeros((Bp, H), jnp.float32)

    # ---- serial recurrence: only the h-dependent matmul stays inside -------
    for t in range(T):                                       # static, fully unrolled
        gates = gx[t * Bp:(t + 1) * Bp, :] + jnp.dot(
            h, whh, preferred_element_type=jnp.float32)      # (Bp, 4H)
        if_act = jax.nn.sigmoid(gates[:, :2 * H])            # vreg-aligned [i | f]
        og = gates[:, 2 * H:]                                 # vreg-aligned [o | g]
        og_act = jnp.where(og_is_sig, jax.nn.sigmoid(og), jnp.tanh(og))
        i_g = if_act[:, :H]
        f_g = if_act[:, H:]
        o_g = og_act[:, :H]
        g_g = og_act[:, H:]
        c = f_g * c + i_g * g_g
        h = o_g * jnp.tanh(c)

    # ---- fused final Linear, clean unmasked (Bp, Cp) store ------------------
    out_ref[...] = (jnp.dot(h, wfc_ref[...], preferred_element_type=jnp.float32)
                    + bfc_ref[...])


def _reorder_gates(w, H):
    """Reorder PyTorch LSTM gate blocks along axis 0: [i, f, g, o] -> [i, f, o, g]."""
    return jnp.concatenate([w[:2 * H], w[3 * H:4 * H], w[2 * H:3 * H]], axis=0)


def prepare_params(params):
    """One-time (init-time) layout of the PyTorch-shaped parameters.

    Returns (kernel_params, num_classes).  Call ONCE and reuse; nothing here
    runs in the per-inference path.
    """
    w_ih, w_hh = params["w_ih"], params["w_hh"]
    b_ih, b_hh = params["b_ih"], params["b_hh"]
    w_fc, b_fc = params["w_fc"], params["b_fc"]

    H = w_hh.shape[1]
    C = w_fc.shape[0]
    Cp = max(_LANE, ((C + _LANE - 1) // _LANE) * _LANE)

    wih = jnp.transpose(_reorder_gates(w_ih, H)).astype(jnp.bfloat16)   # (D, 4H)
    whh = jnp.transpose(_reorder_gates(w_hh, H)).astype(jnp.float32)    # (H, 4H)
    bias = _reorder_gates((b_ih + b_hh).astype(jnp.float32), H).reshape(1, 4 * H)
    wfc = jnp.zeros((H, Cp), jnp.float32).at[:, :C].set(
        jnp.transpose(w_fc).astype(jnp.float32))                         # (H, Cp)
    bfc = jnp.zeros((1, Cp), jnp.float32).at[:, :C].set(b_fc.astype(jnp.float32))

    kparams = {"wih": wih, "whh": whh, "bias": bias, "wfc": wfc, "bfc": bfc}
    kparams = jax.tree_util.tree_map(jax.device_put, kparams)
    return kparams, C


def emotion_rnn_forward(x, kparams, *, num_classes):
    """x: (B, input_size, T) float32 — same layout the PyTorch module receives.

    kparams must come from prepare_params (pre-laid-out, bf16/f32, padded).
    """
    B, D, T = x.shape
    Bp = ((B + _SUBLANE - 1) // _SUBLANE) * _SUBLANE
    Cp = kparams["wfc"].shape[1]

    # Per-call layout plumbing for the (tiny) activation tensor only.
    xt = jnp.transpose(x, (2, 0, 1))                       # (T, B, D), time-major
    xt = jnp.pad(xt, ((0, 0), (0, Bp - B), (0, 0)))        # pad batch to sublane tile
    x_tm = xt.reshape(T * Bp, D)

    vmem = pl.BlockSpec(memory_space=pltpu.MemorySpace.VMEM)
    out = pl.pallas_call(
        _lstm_fc_kernel,
        out_shape=jax.ShapeDtypeStruct((Bp, Cp), jnp.float32),
        in_specs=[vmem] * 6,
        out_specs=vmem,
    )(x_tm, kparams["wih"], kparams["whh"], kparams["bias"],
      kparams["wfc"], kparams["bfc"])
    return out[:B, :num_classes]


def init_params(key, input_size, hidden_size, num_classes):
    """Deterministic synthetic parameters with PyTorch LSTM/Linear shapes."""
    ks = jax.random.split(key, 6)
    k = 1.0 / np.sqrt(hidden_size)
    u = lambda kk, shape: jax.random.uniform(kk, shape, jnp.float32, -k, k)
    return {
        "w_ih": u(ks[0], (4 * hidden_size, input_size)),
        "w_hh": u(ks[1], (4 * hidden_size, hidden_size)),
        "b_ih": u(ks[2], (4 * hidden_size,)),
        "b_hh": u(ks[3], (4 * hidden_size,)),
        "w_fc": u(ks[4], (num_classes, hidden_size)),
        "b_fc": u(ks[5], (num_classes,)),
    }


def _reference_forward(x, params):
    """Pure-JAX f32 reference implementing nn.LSTM (batch_first) + nn.Linear."""
    w_ih, w_hh = params["w_ih"], params["w_hh"]
    b = params["b_ih"] + params["b_hh"]
    B, D, T = x.shape
    H = w_hh.shape[1]
    xs = jnp.transpose(x, (0, 2, 1))              # (B, T, D)
    h = jnp.zeros((B, H), jnp.float32)
    c = jnp.zeros((B, H), jnp.float32)
    for t in range(T):
        g = xs[:, t, :] @ w_ih.T + h @ w_hh.T + b
        i = jax.nn.sigmoid(g[:, 0 * H:1 * H])
        f = jax.nn.sigmoid(g[:, 1 * H:2 * H])
        gg = jnp.tanh(g[:, 2 * H:3 * H])
        o = jax.nn.sigmoid(g[:, 3 * H:4 * H])
        c = f * c + i * gg
        h = o * jnp.tanh(c)
    return h @ params["w_fc"].T + params["b_fc"]


if __name__ == "__main__":
    # small shapes consistent with the module: input_size=128, hidden=64,
    # num_classes=8 (RAVDESS emotions), batch=4, seq_len=8
    B, input_size, hidden_size, num_classes, T = 4, 128, 64, 8, 8

    key = jax.random.PRNGKey(0)
    kx, kp = jax.random.split(key)
    x = jax.random.normal(kx, (B, input_size, T), jnp.float32)
    params = init_params(kp, input_size, hidden_size, num_classes)

    # One-time weight layout (NOT in the per-inference path).
    kparams, C = prepare_params(params)

    fwd = jax.jit(functools.partial(emotion_rnn_forward, num_classes=C))
    out = jax.block_until_ready(fwd(x, kparams))

    ref = _reference_forward(x, params)
    # Tolerance accounts for the bf16 input-projection weights (f32 accumulate).
    np.testing.assert_allclose(np.asarray(out), np.asarray(ref),
                               rtol=2e-2, atol=2e-2)
    assert out.shape == (B, num_classes)
    print("KERNEL_OK")
</pallas_src>

<mosaic_0001>
module attributes {stable_mosaic.version = 11 : i64} {
  func.func @_lstm_fc_kernel(%arg0: memref<64x128xf32, #tpu.memory_space<vmem>>, %arg1: memref<128x256xbf16, #tpu.memory_space<vmem>>, %arg2: memref<64x256xf32, #tpu.memory_space<vmem>>, %arg3: memref<1x256xf32, #tpu.memory_space<vmem>>, %arg4: memref<64x128xf32, #tpu.memory_space<vmem>>, %arg5: memref<1x128xf32, #tpu.memory_space<vmem>>, %arg6: memref<8x128xf32, #tpu.memory_space<vmem>>) attributes {dimension_semantics = [], scalar_prefetch = 0 : i64, scratch_operands = 0 : i64, tpu.core_type = #tpu.core_type<tc>} {
    %c0 = arith.constant 0 : index
    %c0_0 = arith.constant 0 : index
    %0 = vector.load %arg0[%c0, %c0_0] : memref<64x128xf32, #tpu.memory_space<vmem>>, vector<64x128xf32>
    %1 = arith.truncf %0 : vector<64x128xf32> to vector<64x128xbf16>
    %c0_1 = arith.constant 0 : index
    %c0_2 = arith.constant 0 : index
    %2 = vector.load %arg1[%c0_1, %c0_2] : memref<128x256xbf16, #tpu.memory_space<vmem>>, vector<128x256xbf16>
    %cst = arith.constant dense<0.000000e+00> : vector<64x256xf32>
    %3 = tpu.matmul %1, %2, %cst {dimension_numbers = #tpu.dot_dimension_numbers<[1], [0], [0], [1], [0, 0, 1, 1], [], []>} : vector<64x128xbf16>, vector<128x256xbf16>, vector<64x256xf32> -> vector<64x256xf32>
    %c0_3 = arith.constant 0 : index
    %c0_4 = arith.constant 0 : index
    %4 = vector.load %arg3[%c0_3, %c0_4] : memref<1x256xf32, #tpu.memory_space<vmem>>, vector<1x256xf32>
    %5 = vector.broadcast %4 : vector<1x256xf32> to vector<64x256xf32>
    %6 = arith.addf %3, %5 : vector<64x256xf32>
    %c0_5 = arith.constant 0 : index
    %c0_6 = arith.constant 0 : index
    %7 = vector.load %arg2[%c0_5, %c0_6] : memref<64x256xf32, #tpu.memory_space<vmem>>, vector<64x256xf32>
    %8 = tpu.iota {dimensions = array<i32: 1>} : vector<8x128xi32>
    %c64_i32 = arith.constant 64 : i32
    %9 = vector.broadcast %c64_i32 : i32 to vector<8x128xi32>
    %10 = arith.cmpi slt, %8, %9 : vector<8x128xi32>
    %cst_7 = arith.constant 0.000000e+00 : f32
    %11 = vector.broadcast %cst_7 : f32 to vector<8x64xf32>
    %cst_8 = arith.constant 0.000000e+00 : f32
    %12 = vector.broadcast %cst_8 : f32 to vector<8x64xf32>
    %13 = vector.extract_strided_slice %6 {offsets = [0, 0], sizes = [8, 256], strides = [1, 1]} : vector<64x256xf32> to vector<8x256xf32>
    %cst_9 = arith.constant dense<0.000000e+00> : vector<8x256xf32>
    %14 = tpu.matmul %11, %7, %cst_9 {dimension_numbers = #tpu.dot_dimension_numbers<[1], [0], [0], [1], [0, 0, 1, 1], [], []>} : vector<8x64xf32>, vector<64x256xf32>, vector<8x256xf32> -> vector<8x256xf32>
    %15 = arith.addf %13, %14 : vector<8x256xf32>
    %16 = vector.extract_strided_slice %15 {offsets = [0, 0], sizes = [8, 128], strides = [1, 1]} : vector<8x256xf32> to vector<8x128xf32>
    %17 = arith.negf %16 : vector<8x128xf32>
    %18 = math.exp %17 : vector<8x128xf32>
    %cst_10 = arith.constant 1.000000e+00 : f32
    %19 = vector.broadcast %cst_10 : f32 to vector<8x128xf32>
    %20 = arith.addf %19, %18 : vector<8x128xf32>
    %21 = arith.divf %19, %20 : vector<8x128xf32>
    %22 = vector.extract_strided_slice %15 {offsets = [0, 128], sizes = [8, 128], strides = [1, 1]} : vector<8x256xf32> to vector<8x128xf32>
    %23 = arith.negf %22 : vector<8x128xf32>
    %24 = math.exp %23 : vector<8x128xf32>
    %cst_11 = arith.constant 1.000000e+00 : f32
    %25 = vector.broadcast %cst_11 : f32 to vector<8x128xf32>
    %26 = arith.addf %25, %24 : vector<8x128xf32>
    %27 = arith.divf %25, %26 : vector<8x128xf32>
    %28 = math.tanh %22 : vector<8x128xf32>
    %29 = arith.select %10, %27, %28 : vector<8x128xi1>, vector<8x128xf32>
    %30 = vector.extract_strided_slice %21 {offsets = [0, 0], sizes = [8, 64], strides = [1, 1]} : vector<8x128xf32> to vector<8x64xf32>
    %31 = vector.extract_strided_slice %21 {offsets = [0, 64], sizes = [8, 64], strides = [1, 1]} : vector<8x128xf32> to vector<8x64xf32>
    %32 = vector.extract_strided_slice %29 {offsets = [0, 0], sizes = [8, 64], strides = [1, 1]} : vector<8x128xf32> to vector<8x64xf32>
    %33 = vector.extract_strided_slice %29 {offsets = [0, 64], sizes = [8, 64], strides = [1, 1]} : vector<8x128xf32> to vector<8x64xf32>
    %34 = arith.mulf %31, %12 : vector<8x64xf32>
    %35 = arith.mulf %30, %33 : vector<8x64xf32>
    %36 = arith.addf %34, %35 : vector<8x64xf32>
    %37 = math.tanh %36 : vector<8x64xf32>
    %38 = arith.mulf %32, %37 : vector<8x64xf32>
    %39 = vector.extract_strided_slice %6 {offsets = [8, 0], sizes = [8, 256], strides = [1, 1]} : vector<64x256xf32> to vector<8x256xf32>
    %cst_12 = arith.constant dense<0.000000e+00> : vector<8x256xf32>
    %40 = tpu.matmul %38, %7, %cst_12 {dimension_numbers = #tpu.dot_dimension_numbers<[1], [0], [0], [1], [0, 0, 1, 1], [], []>} : vector<8x64xf32>, vector<64x256xf32>, vector<8x256xf32> -> vector<8x256xf32>
    %41 = arith.addf %39, %40 : vector<8x256xf32>
    %42 = vector.extract_strided_slice %41 {offsets = [0, 0], sizes = [8, 128], strides = [1, 1]} : vector<8x256xf32> to vector<8x128xf32>
    %43 = arith.negf %42 : vector<8x128xf32>
    %44 = math.exp %43 : vector<8x128xf32>
    %cst_13 = arith.constant 1.000000e+00 : f32
    %45 = vector.broadcast %cst_13 : f32 to vector<8x128xf32>
    %46 = arith.addf %45, %44 : vector<8x128xf32>
    %47 = arith.divf %45, %46 : vector<8x128xf32>
    %48 = vector.extract_strided_slice %41 {offsets = [0, 128], sizes = [8, 128], strides = [1, 1]} : vector<8x256xf32> to vector<8x128xf32>
    %49 = arith.negf %48 : vector<8x128xf32>
    %50 = math.exp %49 : vector<8x128xf32>
    %cst_14 = arith.constant 1.000000e+00 : f32
    %51 = vector.broadcast %cst_14 : f32 to vector<8x128xf32>
    %52 = arith.addf %51, %50 : vector<8x128xf32>
    %53 = arith.divf %51, %52 : vector<8x128xf32>
    %54 = math.tanh %48 : vector<8x128xf32>
    %55 = arith.select %10, %53, %54 : vector<8x128xi1>, vector<8x128xf32>
    %56 = vector.extract_strided_slice %47 {offsets = [0, 0], sizes = [8, 64], strides = [1, 1]} : vector<8x128xf32> to vector<8x64xf32>
    %57 = vector.extract_strided_slice %47 {offsets = [0, 64], sizes = [8, 64], strides = [1, 1]} : vector<8x128xf32> to vector<8x64xf32>
    %58 = vector.extract_strided_slice %55 {offsets = [0, 0], sizes = [8, 64], strides = [1, 1]} : vector<8x128xf32> to vector<8x64xf32>
    %59 = vector.extract_strided_slice %55 {offsets = [0, 64], sizes = [8, 64], strides = [1, 1]} : vector<8x128xf32> to vector<8x64xf32>
    %60 = arith.mulf %57, %36 : vector<8x64xf32>
    %61 = arith.mulf %56, %59 : vector<8x64xf32>
    %62 = arith.addf %60, %61 : vector<8x64xf32>
    %63 = math.tanh %62 : vector<8x64xf32>
    %64 = arith.mulf %58, %63 : vector<8x64xf32>
    %65 = vector.extract_strided_slice %6 {offsets = [16, 0], sizes = [8, 256], strides = [1, 1]} : vector<64x256xf32> to vector<8x256xf32>
    %cst_15 = arith.constant dense<0.000000e+00> : vector<8x256xf32>
    %66 = tpu.matmul %64, %7, %cst_15 {dimension_numbers = #tpu.dot_dimension_numbers<[1], [0], [0], [1], [0, 0, 1, 1], [], []>} : vector<8x64xf32>, vector<64x256xf32>, vector<8x256xf32> -> vector<8x256xf32>
    %67 = arith.addf %65, %66 : vector<8x256xf32>
    %68 = vector.extract_strided_slice %67 {offsets = [0, 0], sizes = [8, 128], strides = [1, 1]} : vector<8x256xf32> to vector<8x128xf32>
    %69 = arith.negf %68 : vector<8x128xf32>
    %70 = math.exp %69 : vector<8x128xf32>
    %cst_16 = arith.constant 1.000000e+00 : f32
    %71 = vector.broadcast %cst_16 : f32 to vector<8x128xf32>
    %72 = arith.addf %71, %70 : vector<8x128xf32>
    %73 = arith.divf %71, %72 : vector<8x128xf32>
    %74 = vector.extract_strided_slice %67 {offsets = [0, 128], sizes = [8, 128], strides = [1, 1]} : vector<8x256xf32> to vector<8x128xf32>
    %75 = arith.negf %74 : vector<8x128xf32>
    %76 = math.exp %75 : vector<8x128xf32>
    %cst_17 = arith.constant 1.000000e+00 : f32
    %77 = vector.broadcast %cst_17 : f32 to vector<8x128xf32>
    %78 = arith.addf %77, %76 : vector<8x128xf32>
    %79 = arith.divf %77, %78 : vector<8x128xf32>
    %80 = math.tanh %74 : vector<8x128xf32>
    %81 = arith.select %10, %79, %80 : vector<8x128xi1>, vector<8x128xf32>
    %82 = vector.extract_strided_slice %73 {offsets = [0, 0], sizes = [8, 64], strides = [1, 1]} : vector<8x128xf32> to vector<8x64xf32>
    %83 = vector.extract_strided_slice %73 {offsets = [0, 64], sizes = [8, 64], strides = [1, 1]} : vector<8x128xf32> to vector<8x64xf32>
    %84 = vector.extract_strided_slice %81 {offsets = [0, 0], sizes = [8, 64], strides = [1, 1]} : vector<8x128xf32> to vector<8x64xf32>
    %85 = vector.extract_strided_slice %81 {offsets = [0, 64], sizes = [8, 64], strides = [1, 1]} : vector<8x128xf32> to vector<8x64xf32>
    %86 = arith.mulf %83, %62 : vector<8x64xf32>
    %87 = arith.mulf %82, %85 : vector<8x64xf32>
    %88 = arith.addf %86, %87 : vector<8x64xf32>
    %89 = math.tanh %88 : vector<8x64xf32>
    %90 = arith.mulf %84, %89 : vector<8x64xf32>
    %91 = vector.extract_strided_slice %6 {offsets = [24, 0], sizes = [8, 256], strides = [1, 1]} : vector<64x256xf32> to vector<8x256xf32>
    %cst_18 = arith.constant dense<0.000000e+00> : vector<8x256xf32>
    %92 = tpu.matmul %90, %7, %cst_18 {dimension_numbers = #tpu.dot_dimension_numbers<[1], [0], [0], [1], [0, 0, 1, 1], [], []>} : vector<8x64xf32>, vector<64x256xf32>, vector<8x256xf32> -> vector<8x256xf32>
    %93 = arith.addf %91, %92 : vector<8x256xf32>
    %94 = vector.extract_strided_slice %93 {offsets = [0, 0], sizes = [8, 128], strides = [1, 1]} : vector<8x256xf32> to vector<8x128xf32>
    %95 = arith.negf %94 : vector<8x128xf32>
    %96 = math.exp %95 : vector<8x128xf32>
    %cst_19 = arith.constant 1.000000e+00 : f32
    %97 = vector.broadcast %cst_19 : f32 to vector<8x128xf32>
    %98 = arith.addf %97, %96 : vector<8x128xf32>
    %99 = arith.divf %97, %98 : vector<8x128xf32>
    %100 = vector.extract_strided_slice %93 {offsets = [0, 128], sizes = [8, 128], strides = [1, 1]} : vector<8x256xf32> to vector<8x128xf32>
    %101 = arith.negf %100 : vector<8x128xf32>
    %102 = math.exp %101 : vector<8x128xf32>
    %cst_20 = arith.constant 1.000000e+00 : f32
    %103 = vector.broadcast %cst_20 : f32 to vector<8x128xf32>
    %104 = arith.addf %103, %102 : vector<8x128xf32>
    %105 = arith.divf %103, %104 : vector<8x128xf32>
    %106 = math.tanh %100 : vector<8x128xf32>
    %107 = arith.select %10, %105, %106 : vector<8x128xi1>, vector<8x128xf32>
    %108 = vector.extract_strided_slice %99 {offsets = [0, 0], sizes = [8, 64], strides = [1, 1]} : vector<8x128xf32> to vector<8x64xf32>
    %109 = vector.extract_strided_slice %99 {offsets = [0, 64], sizes = [8, 64], strides = [1, 1]} : vector<8x128xf32> to vector<8x64xf32>
    %110 = vector.extract_strided_slice %107 {offsets = [0, 0], sizes = [8, 64], strides = [1, 1]} : vector<8x128xf32> to vector<8x64xf32>
    %111 = vector.extract_strided_slice %107 {offsets = [0, 64], sizes = [8, 64], strides = [1, 1]} : vector<8x128xf32> to vector<8x64xf32>
    %112 = arith.mulf %109, %88 : vector<8x64xf32>
    %113 = arith.mulf %108, %111 : vector<8x64xf32>
    %114 = arith.addf %112, %113 : vector<8x64xf32>
    %115 = math.tanh %114 : vector<8x64xf32>
    %116 = arith.mulf %110, %115 : vector<8x64xf32>
    %117 = vector.extract_strided_slice %6 {offsets = [32, 0], sizes = [8, 256], strides = [1, 1]} : vector<64x256xf32> to vector<8x256xf32>
    %cst_21 = arith.constant dense<0.000000e+00> : vector<8x256xf32>
    %118 = tpu.matmul %116, %7, %cst_21 {dimension_numbers = #tpu.dot_dimension_numbers<[1], [0], [0], [1], [0, 0, 1, 1], [], []>} : vector<8x64xf32>, vector<64x256xf32>, vector<8x256xf32> -> vector<8x256xf32>
    %119 = arith.addf %117, %118 : vector<8x256xf32>
    %120 = vector.extract_strided_slice %119 {offsets = [0, 0], sizes = [8, 128], strides = [1, 1]} : vector<8x256xf32> to vector<8x128xf32>
    %121 = arith.negf %120 : vector<8x128xf32>
    %122 = math.exp %121 : vector<8x128xf32>
    %cst_22 = arith.constant 1.000000e+00 : f32
    %123 = vector.broadcast %cst_22 : f32 to vector<8x128xf32>
    %124 = arith.addf %123, %122 : vector<8x128xf32>
    %125 = arith.divf %123, %124 : vector<8x128xf32>
    %126 = vector.extract_strided_slice %119 {offsets = [0, 128], sizes = [8, 128], strides = [1, 1]} : vector<8x256xf32> to vector<8x128xf32>
    %127 = arith.negf %126 : vector<8x128xf32>
    %128 = math.exp %127 : vector<8x128xf32>
    %cst_23 = arith.constant 1.000000e+00 : f32
    %129 = vector.broadcast %cst_23 : f32 to vector<8x128xf32>
    %130 = arith.addf %129, %128 : vector<8x128xf32>
    %131 = arith.divf %129, %130 : vector<8x128xf32>
    %132 = math.tanh %126 : vector<8x128xf32>
    %133 = arith.select %10, %131, %132 : vector<8x128xi1>, vector<8x128xf32>
    %134 = vector.extract_strided_slice %125 {offsets = [0, 0], sizes = [8, 64], strides = [1, 1]} : vector<8x128xf32> to vector<8x64xf32>
    %135 = vector.extract_strided_slice %125 {offsets = [0, 64], sizes = [8, 64], strides = [1, 1]} : vector<8x128xf32> to vector<8x64xf32>
    %136 = vector.extract_strided_slice %133 {offsets = [0, 0], sizes = [8, 64], strides = [1, 1]} : vector<8x128xf32> to vector<8x64xf32>
    %137 = vector.extract_strided_slice %133 {offsets = [0, 64], sizes = [8, 64], strides = [1, 1]} : vector<8x128xf32> to vector<8x64xf32>
    %138 = arith.mulf %135, %114 : vector<8x64xf32>
    %139 = arith.mulf %134, %137 : vector<8x64xf32>
    %140 = arith.addf %138, %139 : vector<8x64xf32>
    %141 = math.tanh %140 : vector<8x64xf32>
    %142 = arith.mulf %136, %141 : vector<8x64xf32>
    %143 = vector.extract_strided_slice %6 {offsets = [40, 0], sizes = [8, 256], strides = [1, 1]} : vector<64x256xf32> to vector<8x256xf32>
    %cst_24 = arith.constant dense<0.000000e+00> : vector<8x256xf32>
    %144 = tpu.matmul %142, %7, %cst_24 {dimension_numbers = #tpu.dot_dimension_numbers<[1], [0], [0], [1], [0, 0, 1, 1], [], []>} : vector<8x64xf32>, vector<64x256xf32>, vector<8x256xf32> -> vector<8x256xf32>
    %145 = arith.addf %143, %144 : vector<8x256xf32>
    %146 = vector.extract_strided_slice %145 {offsets = [0, 0], sizes = [8, 128], strides = [1, 1]} : vector<8x256xf32> to vector<8x128xf32>
    %147 = arith.negf %146 : vector<8x128xf32>
    %148 = math.exp %147 : vector<8x128xf32>
    %cst_25 = arith.constant 1.000000e+00 : f32
    %149 = vector.broadcast %cst_25 : f32 to vector<8x128xf32>
    %150 = arith.addf %149, %148 : vector<8x128xf32>
    %151 = arith.divf %149, %150 : vector<8x128xf32>
    %152 = vector.extract_strided_slice %145 {offsets = [0, 128], sizes = [8, 128], strides = [1, 1]} : vector<8x256xf32> to vector<8x128xf32>
    %153 = arith.negf %152 : vector<8x128xf32>
    %154 = math.exp %153 : vector<8x128xf32>
    %cst_26 = arith.constant 1.000000e+00 : f32
    %155 = vector.broadcast %cst_26 : f32 to vector<8x128xf32>
    %156 = arith.addf %155, %154 : vector<8x128xf32>
    %157 = arith.divf %155, %156 : vector<8x128xf32>
    %158 = math.tanh %152 : vector<8x128xf32>
    %159 = arith.select %10, %157, %158 : vector<8x128xi1>, vector<8x128xf32>
    %160 = vector.extract_strided_slice %151 {offsets = [0, 0], sizes = [8, 64], strides = [1, 1]} : vector<8x128xf32> to vector<8x64xf32>
    %161 = vector.extract_strided_slice %151 {offsets = [0, 64], sizes = [8, 64], strides = [1, 1]} : vector<8x128xf32> to vector<8x64xf32>
    %162 = vector.extract_strided_slice %159 {offsets = [0, 0], sizes = [8, 64], strides = [1, 1]} : vector<8x128xf32> to vector<8x64xf32>
    %163 = vector.extract_strided_slice %159 {offsets = [0, 64], sizes = [8, 64], strides = [1, 1]} : vector<8x128xf32> to vector<8x64xf32>
    %164 = arith.mulf %161, %140 : vector<8x64xf32>
    %165 = arith.mulf %160, %163 : vector<8x64xf32>
    %166 = arith.addf %164, %165 : vector<8x64xf32>
    %167 = math.tanh %166 : vector<8x64xf32>
    %168 = arith.mulf %162, %167 : vector<8x64xf32>
    %169 = vector.extract_strided_slice %6 {offsets = [48, 0], sizes = [8, 256], strides = [1, 1]} : vector<64x256xf32> to vector<8x256xf32>
    %cst_27 = arith.constant dense<0.000000e+00> : vector<8x256xf32>
    %170 = tpu.matmul %168, %7, %cst_27 {dimension_numbers = #tpu.dot_dimension_numbers<[1], [0], [0], [1], [0, 0, 1, 1], [], []>} : vector<8x64xf32>, vector<64x256xf32>, vector<8x256xf32> -> vector<8x256xf32>
    %171 = arith.addf %169, %170 : vector<8x256xf32>
    %172 = vector.extract_strided_slice %171 {offsets = [0, 0], sizes = [8, 128], strides = [1, 1]} : vector<8x256xf32> to vector<8x128xf32>
    %173 = arith.negf %172 : vector<8x128xf32>
    %174 = math.exp %173 : vector<8x128xf32>
    %cst_28 = arith.constant 1.000000e+00 : f32
    %175 = vector.broadcast %cst_28 : f32 to vector<8x128xf32>
    %176 = arith.addf %175, %174 : vector<8x128xf32>
    %177 = arith.divf %175, %176 : vector<8x128xf32>
    %178 = vector.extract_strided_slice %171 {offsets = [0, 128], sizes = [8, 128], strides = [1, 1]} : vector<8x256xf32> to vector<8x128xf32>
    %179 = arith.negf %178 : vector<8x128xf32>
    %180 = math.exp %179 : vector<8x128xf32>
    %cst_29 = arith.constant 1.000000e+00 : f32
    %181 = vector.broadcast %cst_29 : f32 to vector<8x128xf32>
    %182 = arith.addf %181, %180 : vector<8x128xf32>
    %183 = arith.divf %181, %182 : vector<8x128xf32>
    %184 = math.tanh %178 : vector<8x128xf32>
    %185 = arith.select %10, %183, %184 : vector<8x128xi1>, vector<8x128xf32>
    %186 = vector.extract_strided_slice %177 {offsets = [0, 0], sizes = [8, 64], strides = [1, 1]} : vector<8x128xf32> to vector<8x64xf32>
    %187 = vector.extract_strided_slice %177 {offsets = [0, 64], sizes = [8, 64], strides = [1, 1]} : vector<8x128xf32> to vector<8x64xf32>
    %188 = vector.extract_strided_slice %185 {offsets = [0, 0], sizes = [8, 64], strides = [1, 1]} : vector<8x128xf32> to vector<8x64xf32>
    %189 = vector.extract_strided_slice %185 {offsets = [0, 64], sizes = [8, 64], strides = [1, 1]} : vector<8x128xf32> to vector<8x64xf32>
    %190 = arith.mulf %187, %166 : vector<8x64xf32>
    %191 = arith.mulf %186, %189 : vector<8x64xf32>
    %192 = arith.addf %190, %191 : vector<8x64xf32>
    %193 = math.tanh %192 : vector<8x64xf32>
    %194 = arith.mulf %188, %193 : vector<8x64xf32>
    %195 = vector.extract_strided_slice %6 {offsets = [56, 0], sizes = [8, 256], strides = [1, 1]} : vector<64x256xf32> to vector<8x256xf32>
    %cst_30 = arith.constant dense<0.000000e+00> : vector<8x256xf32>
    %196 = tpu.matmul %194, %7, %cst_30 {dimension_numbers = #tpu.dot_dimension_numbers<[1], [0], [0], [1], [0, 0, 1, 1], [], []>} : vector<8x64xf32>, vector<64x256xf32>, vector<8x256xf32> -> vector<8x256xf32>
    %197 = arith.addf %195, %196 : vector<8x256xf32>
    %198 = vector.extract_strided_slice %197 {offsets = [0, 0], sizes = [8, 128], strides = [1, 1]} : vector<8x256xf32> to vector<8x128xf32>
    %199 = arith.negf %198 : vector<8x128xf32>
    %200 = math.exp %199 : vector<8x128xf32>
    %cst_31 = arith.constant 1.000000e+00 : f32
    %201 = vector.broadcast %cst_31 : f32 to vector<8x128xf32>
    %202 = arith.addf %201, %200 : vector<8x128xf32>
    %203 = arith.divf %201, %202 : vector<8x128xf32>
    %204 = vector.extract_strided_slice %197 {offsets = [0, 128], sizes = [8, 128], strides = [1, 1]} : vector<8x256xf32> to vector<8x128xf32>
    %205 = arith.negf %204 : vector<8x128xf32>
    %206 = math.exp %205 : vector<8x128xf32>
    %cst_32 = arith.constant 1.000000e+00 : f32
    %207 = vector.broadcast %cst_32 : f32 to vector<8x128xf32>
    %208 = arith.addf %207, %206 : vector<8x128xf32>
    %209 = arith.divf %207, %208 : vector<8x128xf32>
    %210 = math.tanh %204 : vector<8x128xf32>
    %211 = arith.select %10, %209, %210 : vector<8x128xi1>, vector<8x128xf32>
    %212 = vector.extract_strided_slice %203 {offsets = [0, 0], sizes = [8, 64], strides = [1, 1]} : vector<8x128xf32> to vector<8x64xf32>
    %213 = vector.extract_strided_slice %203 {offsets = [0, 64], sizes = [8, 64], strides = [1, 1]} : vector<8x128xf32> to vector<8x64xf32>
    %214 = vector.extract_strided_slice %211 {offsets = [0, 0], sizes = [8, 64], strides = [1, 1]} : vector<8x128xf32> to vector<8x64xf32>
    %215 = vector.extract_strided_slice %211 {offsets = [0, 64], sizes = [8, 64], strides = [1, 1]} : vector<8x128xf32> to vector<8x64xf32>
    %216 = arith.mulf %213, %192 : vector<8x64xf32>
    %217 = arith.mulf %212, %215 : vector<8x64xf32>
    %218 = arith.addf %216, %217 : vector<8x64xf32>
    %219 = math.tanh %218 : vector<8x64xf32>
    %220 = arith.mulf %214, %219 : vector<8x64xf32>
    %c0_33 = arith.constant 0 : index
    %c0_34 = arith.constant 0 : index
    %221 = vector.load %arg4[%c0_33, %c0_34] : memref<64x128xf32, #tpu.memory_space<vmem>>, vector<64x128xf32>
    %cst_35 = arith.constant dense<0.000000e+00> : vector<8x128xf32>
    %222 = tpu.matmul %220, %221, %cst_35 {dimension_numbers = #tpu.dot_dimension_numbers<[1], [0], [0], [1], [0, 0, 1, 1], [], []>} : vector<8x64xf32>, vector<64x128xf32>, vector<8x128xf32> -> vector<8x128xf32>
    %c0_36 = arith.constant 0 : index
    %c0_37 = arith.constant 0 : index
    %223 = vector.load %arg5[%c0_36, %c0_37] : memref<1x128xf32, #tpu.memory_space<vmem>>, vector<1x128xf32>
    %224 = vector.broadcast %223 : vector<1x128xf32> to vector<8x128xf32>
    %225 = arith.addf %222, %224 : vector<8x128xf32>
    %c0_38 = arith.constant 0 : index
    %c0_39 = arith.constant 0 : index
    %226 = vector.load %arg6[%c0_38, %c0_39] : memref<8x128xf32, #tpu.memory_space<vmem>>, vector<8x128xf32>
    tpu.vector_store %arg6[%c0_38, %c0_39], %225 {strides = array<i32>} : memref<8x128xf32, #tpu.memory_space<vmem>>, vector<8x128xf32>,
    return
  }
}

</mosaic_0001>

<llo_original>
// kernel: emotion_rnn_forward.1
$region0: #{emotion_rnn_forward.1}
  #allocation0 [shape = 'u32[]', space=smem, size = 0x4, offset = 0x4, fixed_abs, tag = 'smem constant byte address 0x4 - core index']
  #allocation1 [shape = 'u32[72,128]{1,0:T(1,128)}', space=vmem, size = 0x9000, scoped, tag = 'internal scratch']
  %s0 = inlined_call_operand.vmem [shape: f32[64,128], index: 0, kind: input, shape index: {}]
  %s1 = inlined_call_operand.vmem [shape: bf16[128,256], index: 1, kind: input, shape index: {}]
  %s2 = inlined_call_operand.hbm [shape: f32[64,256], index: 2, kind: input, shape index: {}]
  %s3 = inlined_call_operand.vmem [shape: f32[1,256], index: 3, kind: input, shape index: {}]
  %s4 = inlined_call_operand.hbm [shape: f32[64,128], index: 4, kind: input, shape index: {}]
  %s5 = inlined_call_operand.vmem [shape: f32[1,128], index: 5, kind: input, shape index: {}]
  %s6 = inlined_call_operand.vmem [shape: f32[8,128], index: 6, kind: output, shape index: {}]
  %s7 = sld [smem:[#allocation0]]
  $region42: #{emotion_rnn_forward.1} parent=0
    _
  %s9 = ssub.s32 1, %s7
  %s10 = scalar_select 0, %s9, %s7
  $region1: #{emotion_rnn_forward.1} parent=0
    #allocation2 [shape = 'u8[65536]{0}', space=vmem, size = 0x10000, scoped, tag = 'input window, operand 2, single buffered']
    #allocation3 [shape = 's32[1]{0}', space=sflag, size = 0x4, scoped, tag = 'scoped memory for emotion_rnn_forward.1']
    #allocation4 [shape = 'u8[32768]{0}', space=vmem, size = 0x8000, scoped, tag = 'input window, operand 4, single buffered']
    #allocation5 [shape = 's32[1]{0}', space=sflag, size = 0x4, scoped, tag = 'scoped memory for emotion_rnn_forward.1']
    %11 = vsyncpa [#allocation3], 0
    %12 = vsyncpa [#allocation5], 0
    // Predicated region
    $region2: #{emotion_rnn_forward.1} parent=1 // pred_check
      _
    $region3: #{emotion_rnn_forward.1} parent=1 // pred_check_branch
      %14 = sbr.rel (0) target = $region5
    $region4: #{emotion_rnn_forward.1} parent=1 // pred_region
      _
    $region5: #{emotion_rnn_forward.1} parent=1 // pred_fallthru
      _
    // Predicated region
    $region6: #{emotion_rnn_forward.1} parent=1 // pred_check
      _
    $region7: #{emotion_rnn_forward.1} parent=1 // pred_check_branch
      %16 = sbr.rel (0) target = $region9
    $region8: #{emotion_rnn_forward.1} parent=1 // pred_region
      _
    $region9: #{emotion_rnn_forward.1} parent=1 // pred_fallthru
      _
    // Predicated region
    $region10: #{emotion_rnn_forward.1} parent=1 // pred_check
      _
    $region11: #{emotion_rnn_forward.1} parent=1 // pred_check_branch
      %18 = sbr.rel (0) target = $region13
    $region12: #{emotion_rnn_forward.1} parent=1 // pred_region
      %20 = vsyncadd [#allocation3], 0
      %s21 = sshll.u32 %s2, 4
      %s22 = int_to_ptr.hbm [resolvable:$true] %s21
      %s23 = sshll.u32 [#allocation2], 4
      %s24 = int_to_ptr.vmem [resolvable:$true] %s23
      %29 = dma.hbm_to_vmem [thread:$0]  %s22, 2048, %s24, [#allocation3], 256, 256, 16
    $region13: #{emotion_rnn_forward.1} parent=1 // pred_fallthru
      _
    // Predicated region
    $region14: #{emotion_rnn_forward.1} parent=1 // pred_check
      _
    $region15: #{emotion_rnn_forward.1} parent=1 // pred_check_branch
      %31 = sbr.rel (0) target = $region17
    $region16: #{emotion_rnn_forward.1} parent=1 // pred_region
      _
    $region17: #{emotion_rnn_forward.1} parent=1 // pred_fallthru
      _
    // Predicated region
    $region18: #{emotion_rnn_forward.1} parent=1 // pred_check
      _
    $region19: #{emotion_rnn_forward.1} parent=1 // pred_check_branch
      %33 = sbr.rel (0) target = $region21
    $region20: #{emotion_rnn_forward.1} parent=1 // pred_region
      %35 = vsyncadd [#allocation5], 0
      %s36 = sshll.u32 %s4, 4
      %s37 = int_to_ptr.hbm [resolvable:$true] %s36
      %s38 = sshll.u32 [#allocation4], 4
      %s39 = int_to_ptr.vmem [resolvable:$true] %s38
      %44 = dma.hbm_to_vmem [thread:$0]  %s37, 1024, %s39, [#allocation5], 128, 128, 8
    $region21: #{emotion_rnn_forward.1} parent=1 // pred_fallthru
      _
    // Predicated region
    $region22: #{emotion_rnn_forward.1} parent=1 // pred_check
      _
    $region23: #{emotion_rnn_forward.1} parent=1 // pred_check_branch
      %46 = sbr.rel (0) target = $region25
    $region24: #{emotion_rnn_forward.1} parent=1 // pred_region
      _
    $region25: #{emotion_rnn_forward.1} parent=1 // pred_fallthru
      _
    // Predicated region
    $region26: #{emotion_rnn_forward.1} parent=1 // pred_check
      _
    $region27: #{emotion_rnn_forward.1} parent=1 // pred_check_branch
      %48 = sbr.rel (0) target = $region29
    $region28: #{emotion_rnn_forward.1} parent=1 // pred_region
      %50 = dma.done [#allocation3], 2048
    $region29: #{emotion_rnn_forward.1} parent=1 // pred_fallthru
      _
    // Predicated region
    $region30: #{emotion_rnn_forward.1} parent=1 // pred_check
      _
    $region31: #{emotion_rnn_forward.1} parent=1 // pred_check_branch
      %52 = sbr.rel (0) target = $region33
    $region32: #{emotion_rnn_forward.1} parent=1 // pred_region
      %54 = dma.done [#allocation5], 1024
    $region33: #{emotion_rnn_forward.1} parent=1 // pred_fallthru
      _
    %v55 = vld [vmem:[%s0] sm:$0xff]
    %v56 = vld [vmem:[%s0 + $0x8] sm:$0xff]
    %v57 = vld [vmem:[%s0 + $0x10] sm:$0xff]
    %v58 = vld [vmem:[%s0 + $0x18] sm:$0xff]
    %v59 = vld [vmem:[%s0 + $0x20] sm:$0xff]
    %v60 = vld [vmem:[%s0 + $0x28] sm:$0xff]
    %v61 = vld [vmem:[%s0 + $0x30] sm:$0xff]
    %v62 = vld [vmem:[%s0 + $0x38] sm:$0xff]
    %v63 = vpack.c.bf16 %v56, %v55
    %v64 = vpack.c.bf16 %v58, %v57
    %v65 = vpack.c.bf16 %v60, %v59
    %v66 = vpack.c.bf16 %v62, %v61
    %v67 = vld [vmem:[%s1] sm:$0xff]
    %v68 = vld [vmem:[%s1 + $0x8] sm:$0xff]
    %v69 = vld [vmem:[%s1 + $0x10] sm:$0xff]
    %v70 = vld [vmem:[%s1 + $0x18] sm:$0xff]
    %v71 = vld [vmem:[%s1 + $0x20] sm:$0xff]
    %v72 = vld [vmem:[%s1 + $0x28] sm:$0xff]
    %v73 = vld [vmem:[%s1 + $0x30] sm:$0xff]
    %v74 = vld [vmem:[%s1 + $0x38] sm:$0xff]
    %v75 = vld [vmem:[%s1 + $0x40] sm:$0xff]
    %v76 = vld [vmem:[%s1 + $0x48] sm:$0xff]
    %v77 = vld [vmem:[%s1 + $0x50] sm:$0xff]
    %v78 = vld [vmem:[%s1 + $0x58] sm:$0xff]
    %v79 = vld [vmem:[%s1 + $0x60] sm:$0xff]
    %v80 = vld [vmem:[%s1 + $0x68] sm:$0xff]
    %v81 = vld [vmem:[%s1 + $0x70] sm:$0xff]
    %v82 = vld [vmem:[%s1 + $0x78] sm:$0xff]
    %v83 = vld [vmem:[%s3] sm:$0x3]
    %v85 = vperm.slane %v83, 0
    %v86 = vperm.slane %v83, 1
    %v105 = vunpack.c.l.b16 %v67
    %v106 = vunpack.c.h.b16 %v67
    %v107 = vunpack.c.l.b16 %v68
    %v108 = vunpack.c.h.b16 %v68
    %v109 = vunpack.c.l.b16 %v69
    %v110 = vunpack.c.h.b16 %v69
    %v111 = vunpack.c.l.b16 %v70
    %v112 = vunpack.c.h.b16 %v70
    %v113 = vunpack.c.l.b16 %v71
    %v114 = vunpack.c.h.b16 %v71
    %v115 = vunpack.c.l.b16 %v72
    %v116 = vunpack.c.h.b16 %v72
    %v117 = vunpack.c.l.b16 %v73
    %v118 = vunpack.c.h.b16 %v73
    %v119 = vunpack.c.l.b16 %v74
    %v120 = vunpack.c.h.b16 %v74
    %v121 = vunpack.c.l.b16 %v75
    %v122 = vunpack.c.h.b16 %v75
    %v123 = vunpack.c.l.b16 %v76
    %v124 = vunpack.c.h.b16 %v76
    %v125 = vunpack.c.l.b16 %v77
    %v126 = vunpack.c.h.b16 %v77
    %v127 = vunpack.c.l.b16 %v78
    %v128 = vunpack.c.h.b16 %v78
    %v129 = vunpack.c.l.b16 %v79
    %v130 = vunpack.c.h.b16 %v79
    %v131 = vunpack.c.l.b16 %v80
    %v132 = vunpack.c.h.b16 %v80
    %v133 = vunpack.c.l.b16 %v81
    %v134 = vunpack.c.h.b16 %v81
    %v135 = vunpack.c.l.b16 %v82
    %v136 = vunpack.c.h.b16 %v82
    %v137 = vpack.c.b16 %v107, %v105
    %v138 = vpack.c.b16 %v108, %v106
    %v139 = vpack.c.b16 %v111, %v109
    %v140 = vpack.c.b16 %v112, %v110
    %v141 = vpack.c.b16 %v115, %v113
    %v142 = vpack.c.b16 %v116, %v114
    %v143 = vpack.c.b16 %v119, %v117
    %v144 = vpack.c.b16 %v120, %v118
    %v145 = vpack.c.b16 %v123, %v121
    %v146 = vpack.c.b16 %v124, %v122
    %v147 = vpack.c.b16 %v127, %v125
    %v148 = vpack.c.b16 %v128, %v126
    %v149 = vpack.c.b16 %v131, %v129
    %v150 = vpack.c.b16 %v132, %v130
    %v151 = vpack.c.b16 %v135, %v133
    %v152 = vpack.c.b16 %v136, %v134
    %169 = vmatpush.bf16.msra.mxu0 %v151
    %170 = vmatpush.bf16.msra.mxu0 %v149
    %171 = vmatpush.bf16.msra.mxu0 %v147
    %172 = vmatpush.bf16.msra.mxu0 %v145
    %173 = vmatpush.bf16.msra.mxu0 %v143
    %174 = vmatpush.bf16.msra.mxu0 %v141
    %175 = vmatpush.bf16.msra.mxu0 %v139
    %176 = vmatpush.bf16.msra.mxu0 %v137
    %177 = vmatmul.bf16.gmra.mxu0 %v63
    %v178 = vpop.f32.mrf.mxu0
    %v179 = vadd.f32 %v85, %v178
    %v180 = vpop.f32.mrf.mxu0
    %v181 = vadd.f32 %v85, %v180
    %182 = vmatmul.bf16.gmra.mxu0 %v64
    %v183 = vpop.f32.mrf.mxu0
    %v184 = vadd.f32 %v85, %v183
    %v185 = vpop.f32.mrf.mxu0
    %v186 = vadd.f32 %v85, %v185
    %187 = vmatmul.bf16.gmra.mxu0 %v65
    %v188 = vpop.f32.mrf.mxu0
    %v189 = vadd.f32 %v85, %v188
    %v190 = vpop.f32.mrf.mxu0
    %v191 = vadd.f32 %v85, %v190
    %192 = vmatmul.bf16.gmra.mxu0 %v66
    %v193 = vpop.f32.mrf.mxu0
    %v194 = vadd.f32 %v85, %v193
    %v195 = vpop.f32.mrf.mxu0
    %v196 = vadd.f32 %v85, %v195
    %197 = vdwg.mxu0
    %198 = vmatpush.bf16.msra.mxu0 %v152
    %199 = vmatpush.bf16.msra.mxu0 %v150
    %200 = vmatpush.bf16.msra.mxu0 %v148
    %201 = vmatpush.bf16.msra.mxu0 %v146
    %202 = vmatpush.bf16.msra.mxu0 %v144
    %203 = vmatpush.bf16.msra.mxu0 %v142
    %204 = vmatpush.bf16.msra.mxu0 %v140
    %205 = vmatpush.bf16.msra.mxu0 %v138
    %206 = vmatmul.bf16.gmra.mxu0 %v63
    %v207 = vpop.f32.mrf.mxu0
    %v208 = vadd.f32 %v86, %v207
    %v209 = vpop.f32.mrf.mxu0
    %v210 = vadd.f32 %v86, %v209
    %211 = vmatmul.bf16.gmra.mxu0 %v64
    %v212 = vpop.f32.mrf.mxu0
    %v213 = vadd.f32 %v86, %v212
    %v214 = vpop.f32.mrf.mxu0
    %v215 = vadd.f32 %v86, %v214
    %216 = vmatmul.bf16.gmra.mxu0 %v65
    %v217 = vpop.f32.mrf.mxu0
    %v218 = vadd.f32 %v86, %v217
    %v219 = vpop.f32.mrf.mxu0
    %v220 = vadd.f32 %v86, %v219
    %221 = vmatmul.bf16.gmra.mxu0 %v66
    %v222 = vpop.f32.mrf.mxu0
    %v223 = vadd.f32 %v86, %v222
    %v224 = vpop.f32.mrf.mxu0
    %v225 = vadd.f32 %v86, %v224
    %226 = vdwg.mxu0
    %v227 = vld [vmem:[#allocation2] sm:$0xff]
    %v228 = vld [vmem:[#allocation2 + $0x8] sm:$0xff]
    %v229 = vld [vmem:[#allocation2 + $0x10] sm:$0xff]
    %v230 = vld [vmem:[#allocation2 + $0x18] sm:$0xff]
    %v231 = vld [vmem:[#allocation2 + $0x20] sm:$0xff]
    %v232 = vld [vmem:[#allocation2 + $0x28] sm:$0xff]
    %v233 = vld [vmem:[#allocation2 + $0x30] sm:$0xff]
    %v234 = vld [vmem:[#allocation2 + $0x38] sm:$0xff]
    %v235 = vld [vmem:[#allocation2 + $0x40] sm:$0xff]
    %v236 = vld [vmem:[#allocation2 + $0x48] sm:$0xff]
    %v237 = vld [vmem:[#allocation2 + $0x50] sm:$0xff]
    %v238 = vld [vmem:[#allocation2 + $0x58] sm:$0xff]
    %v239 = vld [vmem:[#allocation2 + $0x60] sm:$0xff]
    %v240 = vld [vmem:[#allocation2 + $0x68] sm:$0xff]
    %v241 = vld [vmem:[#allocation2 + $0x70] sm:$0xff]
    %v242 = vld [vmem:[#allocation2 + $0x78] sm:$0xff]
    %v243 = vlaneseq
    %v244 = vand.u32 %v243, 127
    %vm245 = vcmp.lt.s32.totalorder %v244, 64
    %vm246 = vcmask 523264
    %v248 = vsel %vm246, 0.0, 0
    %250 = vmatpush.msra.mxu0 0.0
    %251 = vmatpush.msra.mxu0 0.0
    %252 = vmatpush.msra.mxu0 0.0
    %253 = vmatpush.msra.mxu0 0.0
    %254 = vmatpush.msra.mxu0 0.0
    %255 = vmatpush.msra.mxu0 0.0
    %256 = vmatpush.msra.mxu0 0.0
    %257 = vmatpush.msra.mxu0 0.0
    %258 = vmatpush.msra.mxu0 %v241
    %259 = vmatpush.msra.mxu0 %v239
    %260 = vmatpush.msra.mxu0 %v237
    %261 = vmatpush.msra.mxu0 %v235
    %262 = vmatpush.msra.mxu0 %v233
    %263 = vmatpush.msra.mxu0 %v231
    %264 = vmatpush.msra.mxu0 %v229
    %265 = vmatpush.msra.mxu0 %v227
    %266 = vmatmul.f32.gmra.mxu0 %v248
    %v267 = vpop.f32.mrf.mxu0
    %v268 = vadd.f32 0.0, %v267
    %269 = vdwg.mxu0
    %270 = vmatpush.msra.mxu0 0.0
    %271 = vmatpush.msra.mxu0 0.0
    %272 = vmatpush.msra.mxu0 0.0
    %273 = vmatpush.msra.mxu0 0.0
    %274 = vmatpush.msra.mxu0 0.0
    %275 = vmatpush.msra.mxu0 0.0
    %276 = vmatpush.msra.mxu0 0.0
    %277 = vmatpush.msra.mxu0 0.0
    %278 = vmatpush.msra.mxu0 %v242
    %279 = vmatpush.msra.mxu0 %v240
    %280 = vmatpush.msra.mxu0 %v238
    %281 = vmatpush.msra.mxu0 %v236
    %282 = vmatpush.msra.mxu0 %v234
    %283 = vmatpush.msra.mxu0 %v232
    %284 = vmatpush.msra.mxu0 %v230
    %285 = vmatpush.msra.mxu0 %v228
    %286 = vmatmul.f32.gmra.mxu0 %v248
    %v287 = vpop.f32.mrf.mxu0
    %v288 = vadd.f32 0.0, %v287
    %289 = vdwg.mxu0
    %v290 = vadd.f32 %v179, %v268
    %v291 = vadd.f32 %v208, %v288
    %v292 = vxor.u32 %v290, 2147483648
    %v293 = vmul.f32 %v292, 1.442695
    %v294 = vpow.pop %v293
    %v295 = vadd.f32 %v294, 1.0
    %v296 = vrcp.pop %v295
    %v297 = vmul.f32 %v295, %v296
    %v298 = vsub.f32 1.0, %v297
    %v299 = vmul.f32 %v296, %v298
    %v300 = vadd.f32 %v296, %v299
    %vm301 = vweird.f32 %v295
    %vm302 = vweird.f32 %v296
    %vm303 = vmor %vm301, %vm302
    %v304 = vsel %vm303, %v296, %v300
    %v305 = vand.u32 2147483647, %v295
    %vm306 = vcmp.eq.f32.partialorder %v305, 8.507059e+37
    %v307 = vand.u32 %v295, 2147483648
    %v308 = vor.u32 1.1754944e-38, %v307
    %v309 = vsel %vm306, %v308, %v304
    %v310 = vmul.f32 1.0, %v309
    %v311 = vxor.u32 %v291, 2147483648
    %v312 = vmul.f32 %v311, 1.442695
    %v313 = vpow.pop %v312
    %v314 = vadd.f32 %v313, 1.0
    %v315 = vrcp.pop %v314
    %v316 = vmul.f32 %v314, %v315
    %v317 = vsub.f32 1.0, %v316
    %v318 = vmul.f32 %v315, %v317
    %v319 = vadd.f32 %v315, %v318
    %vm320 = vweird.f32 %v314
    %vm321 = vweird.f32 %v315
    %vm322 = vmor %vm320, %vm321
    %v323 = vsel %vm322, %v315, %v319
    %v324 = vand.u32 2147483647, %v314
    %vm325 = vcmp.eq.f32.partialorder %v324, 8.507059e+37
    %v326 = vand.u32 %v314, 2147483648
    %v327 = vor.u32 1.1754944e-38, %v326
    %v328 = vsel %vm325, %v327, %v323
    %v329 = vmul.f32 1.0, %v328
    %v330 = vtanh.pop %v291
    %v331 = vsel %vm245, %v329, %v330
    %v332 = vmul.f32 %v310, 0.0
    %334 = vrot.lane.b32.xlu0 %v331, 64
    %v335 = vpop.permute.xlu0 %334
    %v337 = vmul.f32 %v310, %v335
    %339 = vrot.lane.b32.xlu0 %v337, 64
    %v340 = vpop.permute.xlu0 %339
    %v342 = vadd.f32 %v332, %v340
    %v343 = vtanh.pop %v342
    %345 = vrot.lane.b32.xlu0 %v343, 64
    %v346 = vpop.permute.xlu0 %345
    %v348 = vmul.f32 %v331, %v346
    %v350 = vsel %vm246, %v348, 0
    %352 = vmatpush.msra.mxu0 0.0
    %353 = vmatpush.msra.mxu0 0.0
    %354 = vmatpush.msra.mxu0 0.0
    %355 = vmatpush.msra.mxu0 0.0
    %356 = vmatpush.msra.mxu0 0.0
    %357 = vmatpush.msra.mxu0 0.0
    %358 = vmatpush.msra.mxu0 0.0
    %359 = vmatpush.msra.mxu0 0.0
    %360 = vmatpush.msra.mxu0 %v241
    %361 = vmatpush.msra.mxu0 %v239
    %362 = vmatpush.msra.mxu0 %v237
    %363 = vmatpush.msra.mxu0 %v235
    %364 = vmatpush.msra.mxu0 %v233
    %365 = vmatpush.msra.mxu0 %v231
    %366 = vmatpush.msra.mxu0 %v229
    %367 = vmatpush.msra.mxu0 %v227
    %368 = vmatmul.f32.gmra.mxu0 %v350
    %v369 = vpop.f32.mrf.mxu0
    %v370 = vadd.f32 0.0, %v369
    %371 = vdwg.mxu0
    %372 = vmatpush.msra.mxu0 0.0
    %373 = vmatpush.msra.mxu0 0.0
    %374 = vmatpush.msra.mxu0 0.0
    %375 = vmatpush.msra.mxu0 0.0
    %376 = vmatpush.msra.mxu0 0.0
    %377 = vmatpush.msra.mxu0 0.0
    %378 = vmatpush.msra.mxu0 0.0
    %379 = vmatpush.msra.mxu0 0.0
    %380 = vmatpush.msra.mxu0 %v242
    %381 = vmatpush.msra.mxu0 %v240
    %382 = vmatpush.msra.mxu0 %v238
    %383 = vmatpush.msra.mxu0 %v236
    %384 = vmatpush.msra.mxu0 %v234
    %385 = vmatpush.msra.mxu0 %v232
    %386 = vmatpush.msra.mxu0 %v230
    %387 = vmatpush.msra.mxu0 %v228
    %388 = vmatmul.f32.gmra.mxu0 %v350
    %v389 = vpop.f32.mrf.mxu0
    %v390 = vadd.f32 0.0, %v389
    %391 = vdwg.mxu0
    %v392 = vadd.f32 %v181, %v370
    %v393 = vadd.f32 %v210, %v390
    %v394 = vxor.u32 %v392, 2147483648
    %v395 = vmul.f32 %v394, 1.442695
    %v396 = vpow.pop %v395
    %v397 = vadd.f32 %v396, 1.0
    %v398 = vrcp.pop %v397
    %v399 = vmul.f32 %v397, %v398
    %v400 = vsub.f32 1.0, %v399
    %v401 = vmul.f32 %v398, %v400
    %v402 = vadd.f32 %v398, %v401
    %vm403 = vweird.f32 %v397
    %vm404 = vweird.f32 %v398
    %vm405 = vmor %vm403, %vm404
    %v406 = vsel %vm405, %v398, %v402
    %v407 = vand.u32 2147483647, %v397
    %vm408 = vcmp.eq.f32.partialorder %v407, 8.507059e+37
    %v409 = vand.u32 %v397, 2147483648
    %v410 = vor.u32 1.1754944e-38, %v409
    %v411 = vsel %vm408, %v410, %v406
    %v412 = vmul.f32 1.0, %v411
    %v413 = vxor.u32 %v393, 2147483648
    %v414 = vmul.f32 %v413, 1.442695
    %v415 = vpow.pop %v414
    %v416 = vadd.f32 %v415, 1.0
    %v417 = vrcp.pop %v416
    %v418 = vmul.f32 %v416, %v417
    %v419 = vsub.f32 1.0, %v418
    %v420 = vmul.f32 %v417, %v419
    %v421 = vadd.f32 %v417, %v420
    %vm422 = vweird.f32 %v416
    %vm423 = vweird.f32 %v417
    %vm424 = vmor %vm422, %vm423
    %v425 = vsel %vm424, %v417, %v421
    %v426 = vand.u32 2147483647, %v416
    %vm427 = vcmp.eq.f32.partialorder %v426, 8.507059e+37
    %v428 = vand.u32 %v416, 2147483648
    %v429 = vor.u32 1.1754944e-38, %v428
    %v430 = vsel %vm427, %v429, %v425
    %v431 = vmul.f32 1.0, %v430
    %v432 = vtanh.pop %v393
    %v433 = vsel %vm245, %v431, %v432
    %v434 = vmul.f32 %v412, %v342
    %436 = vrot.lane.b32.xlu0 %v433, 64
    %v437 = vpop.permute.xlu0 %436
    %v439 = vmul.f32 %v412, %v437
    %441 = vrot.lane.b32.xlu0 %v439, 64
    %v442 = vpop.permute.xlu0 %441
    %v444 = vadd.f32 %v434, %v442
    %v445 = vtanh.pop %v444
    %447 = vrot.lane.b32.xlu0 %v445, 64
    %v448 = vpop.permute.xlu0 %447
    %v450 = vmul.f32 %v433, %v448
    %v452 = vsel %vm246, %v450, 0
    %454 = vmatpush.msra.mxu0 0.0
    %455 = vmatpush.msra.mxu0 0.0
    %456 = vmatpush.msra.mxu0 0.0
    %457 = vmatpush.msra.mxu0 0.0
    %458 = vmatpush.msra.mxu0 0.0
    %459 = vmatpush.msra.mxu0 0.0
    %460 = vmatpush.msra.mxu0 0.0
    %461 = vmatpush.msra.mxu0 0.0
    %462 = vmatpush.msra.mxu0 %v241
    %463 = vmatpush.msra.mxu0 %v239
    %464 = vmatpush.msra.mxu0 %v237
    %465 = vmatpush.msra.mxu0 %v235
    %466 = vmatpush.msra.mxu0 %v233
    %467 = vmatpush.msra.mxu0 %v231
    %468 = vmatpush.msra.mxu0 %v229
    %469 = vmatpush.msra.mxu0 %v227
    %470 = vmatmul.f32.gmra.mxu0 %v452
    %v471 = vpop.f32.mrf.mxu0
    %v472 = vadd.f32 0.0, %v471
    %473 = vdwg.mxu0
    %474 = vmatpush.msra.mxu0 0.0
    %475 = vmatpush.msra.mxu0 0.0
    %476 = vmatpush.msra.mxu0 0.0
    %477 = vmatpush.msra.mxu0 0.0
    %478 = vmatpush.msra.mxu0 0.0
    %479 = vmatpush.msra.mxu0 0.0
    %480 = vmatpush.msra.mxu0 0.0
    %481 = vmatpush.msra.mxu0 0.0
    %482 = vmatpush.msra.mxu0 %v242
    %483 = vmatpush.msra.mxu0 %v240
    %484 = vmatpush.msra.mxu0 %v238
    %485 = vmatpush.msra.mxu0 %v236
    %486 = vmatpush.msra.mxu0 %v234
    %487 = vmatpush.msra.mxu0 %v232
    %488 = vmatpush.msra.mxu0 %v230
    %489 = vmatpush.msra.mxu0 %v228
    %490 = vmatmul.f32.gmra.mxu0 %v452
    %v491 = vpop.f32.mrf.mxu0
    %v492 = vadd.f32 0.0, %v491
    %493 = vdwg.mxu0
    %v494 = vadd.f32 %v184, %v472
    %v495 = vadd.f32 %v213, %v492
    %v496 = vxor.u32 %v494, 2147483648
    %v497 = vmul.f32 %v496, 1.442695
    %v498 = vpow.pop %v497
    %v499 = vadd.f32 %v498, 1.0
    %v500 = vrcp.pop %v499
    %v501 = vmul.f32 %v499, %v500
    %v502 = vsub.f32 1.0, %v501
    %v503 = vmul.f32 %v500, %v502
    %v504 = vadd.f32 %v500, %v503
    %vm505 = vweird.f32 %v499
    %vm506 = vweird.f32 %v500
    %vm507 = vmor %vm505, %vm506
    %v508 = vsel %vm507, %v500, %v504
    %v509 = vand.u32 2147483647, %v499
    %vm510 = vcmp.eq.f32.partialorder %v509, 8.507059e+37
    %v511 = vand.u32 %v499, 2147483648
    %v512 = vor.u32 1.1754944e-38, %v511
    %v513 = vsel %vm510, %v512, %v508
    %v514 = vmul.f32 1.0, %v513
    %v515 = vxor.u32 %v495, 2147483648
    %v516 = vmul.f32 %v515, 1.442695
    %v517 = vpow.pop %v516
    %v518 = vadd.f32 %v517, 1.0
    %v519 = vrcp.pop %v518
    %v520 = vmul.f32 %v518, %v519
    %v521 = vsub.f32 1.0, %v520
    %v522 = vmul.f32 %v519, %v521
    %v523 = vadd.f32 %v519, %v522
    %vm524 = vweird.f32 %v518
    %vm525 = vweird.f32 %v519
    %vm526 = vmor %vm524, %vm525
    %v527 = vsel %vm526, %v519, %v523
    %v528 = vand.u32 2147483647, %v518
    %vm529 = vcmp.eq.f32.partialorder %v528, 8.507059e+37
    %v530 = vand.u32 %v518, 2147483648
    %v531 = vor.u32 1.1754944e-38, %v530
    %v532 = vsel %vm529, %v531, %v527
    %v533 = vmul.f32 1.0, %v532
    %v534 = vtanh.pop %v495
    %v535 = vsel %vm245, %v533, %v534
    %v536 = vmul.f32 %v514, %v444
    %538 = vrot.lane.b32.xlu0 %v535, 64
    %v539 = vpop.permute.xlu0 %538
    %v541 = vmul.f32 %v514, %v539
    %543 = vrot.lane.b32.xlu0 %v541, 64
    %v544 = vpop.permute.xlu0 %543
    %v546 = vadd.f32 %v536, %v544
    %v547 = vtanh.pop %v546
    %549 = vrot.lane.b32.xlu0 %v547, 64
    %v550 = vpop.permute.xlu0 %549
    %v552 = vmul.f32 %v535, %v550
    %v554 = vsel %vm246, %v552, 0
    %556 = vmatpush.msra.mxu0 0.0
    %557 = vmatpush.msra.mxu0 0.0
    %558 = vmatpush.msra.mxu0 0.0
    %559 = vmatpush.msra.mxu0 0.0
    %560 = vmatpush.msra.mxu0 0.0
    %561 = vmatpush.msra.mxu0 0.0
    %562 = vmatpush.msra.mxu0 0.0
    %563 = vmatpush.msra.mxu0 0.0
    %564 = vmatpush.msra.mxu0 %v241
    %565 = vmatpush.msra.mxu0 %v239
    %566 = vmatpush.msra.mxu0 %v237
    %567 = vmatpush.msra.mxu0 %v235
    %568 = vmatpush.msra.mxu0 %v233
    %569 = vmatpush.msra.mxu0 %v231
    %570 = vmatpush.msra.mxu0 %v229
    %571 = vmatpush.msra.mxu0 %v227
    %572 = vmatmul.f32.gmra.mxu0 %v554
    %v573 = vpop.f32.mrf.mxu0
    %v574 = vadd.f32 0.0, %v573
    %575 = vdwg.mxu0
    %576 = vmatpush.msra.mxu0 0.0
    %577 = vmatpush.msra.mxu0 0.0
    %578 = vmatpush.msra.mxu0 0.0
    %579 = vmatpush.msra.mxu0 0.0
    %580 = vmatpush.msra.mxu0 0.0
    %581 = vmatpush.msra.mxu0 0.0
    %582 = vmatpush.msra.mxu0 0.0
    %583 = vmatpush.msra.mxu0 0.0
    %584 = vmatpush.msra.mxu0 %v242
    %585 = vmatpush.msra.mxu0 %v240
    %586 = vmatpush.msra.mxu0 %v238
    %587 = vmatpush.msra.mxu0 %v236
    %588 = vmatpush.msra.mxu0 %v234
    %589 = vmatpush.msra.mxu0 %v232
    %590 = vmatpush.msra.mxu0 %v230
    %591 = vmatpush.msra.mxu0 %v228
    %592 = vmatmul.f32.gmra.mxu0 %v554
    %v593 = vpop.f32.mrf.mxu0
    %v594 = vadd.f32 0.0, %v593
    %595 = vdwg.mxu0
    %v596 = vadd.f32 %v186, %v574
    %v597 = vadd.f32 %v215, %v594
    %v598 = vxor.u32 %v596, 2147483648
    %v599 = vmul.f32 %v598, 1.442695
    %v600 = vpow.pop %v599
    %v601 = vadd.f32 %v600, 1.0
    %v602 = vrcp.pop %v601
    %v603 = vmul.f32 %v601, %v602
    %v604 = vsub.f32 1.0, %v603
    %v605 = vmul.f32 %v602, %v604
    %v606 = vadd.f32 %v602, %v605
    %vm607 = vweird.f32 %v601
    %vm608 = vweird.f32 %v602
    %vm609 = vmor %vm607, %vm608
    %v610 = vsel %vm609, %v602, %v606
    %v611 = vand.u32 2147483647, %v601
    %vm612 = vcmp.eq.f32.partialorder %v611, 8.507059e+37
    %v613 = vand.u32 %v601, 2147483648
    %v614 = vor.u32 1.1754944e-38, %v613
    %v615 = vsel %vm612, %v614, %v610
    %v616 = vmul.f32 1.0, %v615
    %v617 = vxor.u32 %v597, 2147483648
    %v618 = vmul.f32 %v617, 1.442695
    %v619 = vpow.pop %v618
    %v620 = vadd.f32 %v619, 1.0
    %v621 = vrcp.pop %v620
    %v622 = vmul.f32 %v620, %v621
    %v623 = vsub.f32 1.0, %v622
    %v624 = vmul.f32 %v621, %v623
    %v625 = vadd.f32 %v621, %v624
    %vm626 = vweird.f32 %v620
    %vm627 = vweird.f32 %v621
    %vm628 = vmor %vm626, %vm627
    %v629 = vsel %vm628, %v621, %v625
    %v630 = vand.u32 2147483647, %v620
    %vm631 = vcmp.eq.f32.partialorder %v630, 8.507059e+37
    %v632 = vand.u32 %v620, 2147483648
    %v633 = vor.u32 1.1754944e-38, %v632
    %v634 = vsel %vm631, %v633, %v629
    %v635 = vmul.f32 1.0, %v634
    %v636 = vtanh.pop %v597
    %v637 = vsel %vm245, %v635, %v636
    %v638 = vmul.f32 %v616, %v546
    %640 = vrot.lane.b32.xlu0 %v637, 64
    %v641 = vpop.permute.xlu0 %640
    %v643 = vmul.f32 %v616, %v641
    %645 = vrot.lane.b32.xlu0 %v643, 64
    %v646 = vpop.permute.xlu0 %645
    %v648 = vadd.f32 %v638, %v646
    %v649 = vtanh.pop %v648
    %651 = vrot.lane.b32.xlu0 %v649, 64
    %v652 = vpop.permute.xlu0 %651
    %v654 = vmul.f32 %v637, %v652
    %v656 = vsel %vm246, %v654, 0
    %658 = vmatpush.msra.mxu0 0.0
    %659 = vmatpush.msra.mxu0 0.0
    %660 = vmatpush.msra.mxu0 0.0
    %661 = vmatpush.msra.mxu0 0.0
    %662 = vmatpush.msra.mxu0 0.0
    %663 = vmatpush.msra.mxu0 0.0
    %664 = vmatpush.msra.mxu0 0.0
    %665 = vmatpush.msra.mxu0 0.0
    %666 = vmatpush.msra.mxu0 %v241
    %667 = vmatpush.msra.mxu0 %v239
    %668 = vmatpush.msra.mxu0 %v237
    %669 = vmatpush.msra.mxu0 %v235
    %670 = vmatpush.msra.mxu0 %v233
    %671 = vmatpush.msra.mxu0 %v231
    %672 = vmatpush.msra.mxu0 %v229
    %673 = vmatpush.msra.mxu0 %v227
    %674 = vmatmul.f32.gmra.mxu0 %v656
    %v675 = vpop.f32.mrf.mxu0
    %v676 = vadd.f32 0.0, %v675
    %677 = vdwg.mxu0
    %678 = vmatpush.msra.mxu0 0.0
    %679 = vmatpush.msra.mxu0 0.0
    %680 = vmatpush.msra.mxu0 0.0
    %681 = vmatpush.msra.mxu0 0.0
    %682 = vmatpush.msra.mxu0 0.0
    %683 = vmatpush.msra.mxu0 0.0
    %684 = vmatpush.msra.mxu0 0.0
    %685 = vmatpush.msra.mxu0 0.0
    %686 = vmatpush.msra.mxu0 %v242
    %687 = vmatpush.msra.mxu0 %v240
    %688 = vmatpush.msra.mxu0 %v238
    %689 = vmatpush.msra.mxu0 %v236
    %690 = vmatpush.msra.mxu0 %v234
    %691 = vmatpush.msra.mxu0 %v232
    %692 = vmatpush.msra.mxu0 %v230
    %693 = vmatpush.msra.mxu0 %v228
    %694 = vmatmul.f32.gmra.mxu0 %v656
    %v695 = vpop.f32.mrf.mxu0
    %v696 = vadd.f32 0.0, %v695
    %697 = vdwg.mxu0
    %v698 = vadd.f32 %v189, %v676
    %v699 = vadd.f32 %v218, %v696
    %v700 = vxor.u32 %v698, 2147483648
    %v701 = vmul.f32 %v700, 1.442695
    %v702 = vpow.pop %v701
    %v703 = vadd.f32 %v702, 1.0
    %v704 = vrcp.pop %v703
    %v705 = vmul.f32 %v703, %v704
    %v706 = vsub.f32 1.0, %v705
    %v707 = vmul.f32 %v704, %v706
    %v708 = vadd.f32 %v704, %v707
    %vm709 = vweird.f32 %v703
    %vm710 = vweird.f32 %v704
    %vm711 = vmor %vm709, %vm710
    %v712 = vsel %vm711, %v704, %v708
    %v713 = vand.u32 2147483647, %v703
    %vm714 = vcmp.eq.f32.partialorder %v713, 8.507059e+37
    %v715 = vand.u32 %v703, 2147483648
    %v716 = vor.u32 1.1754944e-38, %v715
    %v717 = vsel %vm714, %v716, %v712
    %v718 = vmul.f32 1.0, %v717
    %v719 = vxor.u32 %v699, 2147483648
    %v720 = vmul.f32 %v719, 1.442695
    %v721 = vpow.pop %v720
    %v722 = vadd.f32 %v721, 1.0
    %v723 = vrcp.pop %v722
    %v724 = vmul.f32 %v722, %v723
    %v725 = vsub.f32 1.0, %v724
    %v726 = vmul.f32 %v723, %v725
    %v727 = vadd.f32 %v723, %v726
    %vm728 = vweird.f32 %v722
    %vm729 = vweird.f32 %v723
    %vm730 = vmor %vm728, %vm729
    %v731 = vsel %vm730, %v723, %v727
    %v732 = vand.u32 2147483647, %v722
    %vm733 = vcmp.eq.f32.partialorder %v732, 8.507059e+37
    %v734 = vand.u32 %v722, 2147483648
    %v735 = vor.u32 1.1754944e-38, %v734
    %v736 = vsel %vm733, %v735, %v731
    %v737 = vmul.f32 1.0, %v736
    %v738 = vtanh.pop %v699
    %v739 = vsel %vm245, %v737, %v738
    %v740 = vmul.f32 %v718, %v648
    %742 = vrot.lane.b32.xlu0 %v739, 64
    %v743 = vpop.permute.xlu0 %742
    %v745 = vmul.f32 %v718, %v743
    %747 = vrot.lane.b32.xlu0 %v745, 64
    %v748 = vpop.permute.xlu0 %747
    %v750 = vadd.f32 %v740, %v748
    %v751 = vtanh.pop %v750
    %753 = vrot.lane.b32.xlu0 %v751, 64
    %v754 = vpop.permute.xlu0 %753
    %v756 = vmul.f32 %v739, %v754
    %v758 = vsel %vm246, %v756, 0
    %760 = vmatpush.msra.mxu0 0.0
    %761 = vmatpush.msra.mxu0 0.0
    %762 = vmatpush.msra.mxu0 0.0
    %763 = vmatpush.msra.mxu0 0.0
    %764 = vmatpush.msra.mxu0 0.0
    %765 = vmatpush.msra.mxu0 0.0
    %766 = vmatpush.msra.mxu0 0.0
    %767 = vmatpush.msra.mxu0 0.0
    %768 = vmatpush.msra.mxu0 %v241
    %769 = vmatpush.msra.mxu0 %v239
    %770 = vmatpush.msra.mxu0 %v237
    %771 = vmatpush.msra.mxu0 %v235
    %772 = vmatpush.msra.mxu0 %v233
    %773 = vmatpush.msra.mxu0 %v231
    %774 = vmatpush.msra.mxu0 %v229
    %775 = vmatpush.msra.mxu0 %v227
    %776 = vmatmul.f32.gmra.mxu0 %v758
    %v777 = vpop.f32.mrf.mxu0
    %v778 = vadd.f32 0.0, %v777
    %779 = vdwg.mxu0
    %780 = vmatpush.msra.mxu0 0.0
    %781 = vmatpush.msra.mxu0 0.0
    %782 = vmatpush.msra.mxu0 0.0
    %783 = vmatpush.msra.mxu0 0.0
    %784 = vmatpush.msra.mxu0 0.0
    %785 = vmatpush.msra.mxu0 0.0
    %786 = vmatpush.msra.mxu0 0.0
    %787 = vmatpush.msra.mxu0 0.0
    %788 = vmatpush.msra.mxu0 %v242
    %789 = vmatpush.msra.mxu0 %v240
    %790 = vmatpush.msra.mxu0 %v238
    %791 = vmatpush.msra.mxu0 %v236
    %792 = vmatpush.msra.mxu0 %v234
    %793 = vmatpush.msra.mxu0 %v232
    %794 = vmatpush.msra.mxu0 %v230
    %795 = vmatpush.msra.mxu0 %v228
    %796 = vmatmul.f32.gmra.mxu0 %v758
    %v797 = vpop.f32.mrf.mxu0
    %v798 = vadd.f32 0.0, %v797
    %799 = vdwg.mxu0
    %v800 = vadd.f32 %v191, %v778
    %v801 = vadd.f32 %v220, %v798
    %v802 = vxor.u32 %v800, 2147483648
    %v803 = vmul.f32 %v802, 1.442695
    %v804 = vpow.pop %v803
    %v805 = vadd.f32 %v804, 1.0
    %v806 = vrcp.pop %v805
    %v807 = vmul.f32 %v805, %v806
    %v808 = vsub.f32 1.0, %v807
    %v809 = vmul.f32 %v806, %v808
    %v810 = vadd.f32 %v806, %v809
    %vm811 = vweird.f32 %v805
    %vm812 = vweird.f32 %v806
    %vm813 = vmor %vm811, %vm812
    %v814 = vsel %vm813, %v806, %v810
    %v815 = vand.u32 2147483647, %v805
    %vm816 = vcmp.eq.f32.partialorder %v815, 8.507059e+37
    %v817 = vand.u32 %v805, 2147483648
    %v818 = vor.u32 1.1754944e-38, %v817
    %v819 = vsel %vm816, %v818, %v814
    %v820 = vmul.f32 1.0, %v819
    %v821 = vxor.u32 %v801, 2147483648
    %v822 = vmul.f32 %v821, 1.442695
    %v823 = vpow.pop %v822
    %v824 = vadd.f32 %v823, 1.0
    %v825 = vrcp.pop %v824
    %v826 = vmul.f32 %v824, %v825
    %v827 = vsub.f32 1.0, %v826
    %v828 = vmul.f32 %v825, %v827
    %v829 = vadd.f32 %v825, %v828
    %vm830 = vweird.f32 %v824
    %vm831 = vweird.f32 %v825
    %vm832 = vmor %vm830, %vm831
    %v833 = vsel %vm832, %v825, %v829
    %v834 = vand.u32 2147483647, %v824
    %vm835 = vcmp.eq.f32.partialorder %v834, 8.507059e+37
    %v836 = vand.u32 %v824, 2147483648
    %v837 = vor.u32 1.1754944e-38, %v836
    %v838 = vsel %vm835, %v837, %v833
    %v839 = vmul.f32 1.0, %v838
    %v840 = vtanh.pop %v801
    %v841 = vsel %vm245, %v839, %v840
    %v842 = vmul.f32 %v820, %v750
    %844 = vrot.lane.b32.xlu0 %v841, 64
    %v845 = vpop.permute.xlu0 %844
    %v847 = vmul.f32 %v820, %v845
    %849 = vrot.lane.b32.xlu0 %v847, 64
    %v850 = vpop.permute.xlu0 %849
    %v852 = vadd.f32 %v842, %v850
    %v853 = vtanh.pop %v852
    %855 = vrot.lane.b32.xlu0 %v853, 64
    %v856 = vpop.permute.xlu0 %855
    %v858 = vmul.f32 %v841, %v856
    %v860 = vsel %vm246, %v858, 0
    %862 = vmatpush.msra.mxu0 0.0
    %863 = vmatpush.msra.mxu0 0.0
    %864 = vmatpush.msra.mxu0 0.0
    %865 = vmatpush.msra.mxu0 0.0
    %866 = vmatpush.msra.mxu0 0.0
    %867 = vmatpush.msra.mxu0 0.0
    %868 = vmatpush.msra.mxu0 0.0
    %869 = vmatpush.msra.mxu0 0.0
    %870 = vmatpush.msra.mxu0 %v241
    %871 = vmatpush.msra.mxu0 %v239
    %872 = vmatpush.msra.mxu0 %v237
    %873 = vmatpush.msra.mxu0 %v235
    %874 = vmatpush.msra.mxu0 %v233
    %875 = vmatpush.msra.mxu0 %v231
    %876 = vmatpush.msra.mxu0 %v229
    %877 = vmatpush.msra.mxu0 %v227
    %878 = vmatmul.f32.gmra.mxu0 %v860
    %v879 = vpop.f32.mrf.mxu0
    %v880 = vadd.f32 0.0, %v879
    %881 = vdwg.mxu0
    %882 = vmatpush.msra.mxu0 0.0
    %883 = vmatpush.msra.mxu0 0.0
    %884 = vmatpush.msra.mxu0 0.0
    %885 = vmatpush.msra.mxu0 0.0
    %886 = vmatpush.msra.mxu0 0.0
    %887 = vmatpush.msra.mxu0 0.0
    %888 = vmatpush.msra.mxu0 0.0
    %889 = vmatpush.msra.mxu0 0.0
    %890 = vmatpush.msra.mxu0 %v242
    %891 = vmatpush.msra.mxu0 %v240
    %892 = vmatpush.msra.mxu0 %v238
    %893 = vmatpush.msra.mxu0 %v236
    %894 = vmatpush.msra.mxu0 %v234
    %895 = vmatpush.msra.mxu0 %v232
    %896 = vmatpush.msra.mxu0 %v230
    %897 = vmatpush.msra.mxu0 %v228
    %898 = vmatmul.f32.gmra.mxu0 %v860
    %v899 = vpop.f32.mrf.mxu0
    %v900 = vadd.f32 0.0, %v899
    %901 = vdwg.mxu0
    %v902 = vadd.f32 %v194, %v880
    %v903 = vadd.f32 %v223, %v900
    %v904 = vxor.u32 %v902, 2147483648
    %v905 = vmul.f32 %v904, 1.442695
    %v906 = vpow.pop %v905
    %v907 = vadd.f32 %v906, 1.0
    %v908 = vrcp.pop %v907
    %v909 = vmul.f32 %v907, %v908
    %v910 = vsub.f32 1.0, %v909
    %v911 = vmul.f32 %v908, %v910
    %v912 = vadd.f32 %v908, %v911
    %vm913 = vweird.f32 %v907
    %vm914 = vweird.f32 %v908
    %vm915 = vmor %vm913, %vm914
    %v916 = vsel %vm915, %v908, %v912
    %v917 = vand.u32 2147483647, %v907
    %vm918 = vcmp.eq.f32.partialorder %v917, 8.507059e+37
    %v919 = vand.u32 %v907, 2147483648
    %v920 = vor.u32 1.1754944e-38, %v919
    %v921 = vsel %vm918, %v920, %v916
    %v922 = vmul.f32 1.0, %v921
    %v923 = vxor.u32 %v903, 2147483648
    %v924 = vmul.f32 %v923, 1.442695
    %v925 = vpow.pop %v924
    %v926 = vadd.f32 %v925, 1.0
    %v927 = vrcp.pop %v926
    %v928 = vmul.f32 %v926, %v927
    %v929 = vsub.f32 1.0, %v928
    %v930 = vmul.f32 %v927, %v929
    %v931 = vadd.f32 %v927, %v930
    %vm932 = vweird.f32 %v926
    %vm933 = vweird.f32 %v927
    %vm934 = vmor %vm932, %vm933
    %v935 = vsel %vm934, %v927, %v931
    %v936 = vand.u32 2147483647, %v926
    %vm937 = vcmp.eq.f32.partialorder %v936, 8.507059e+37
    %v938 = vand.u32 %v926, 2147483648
    %v939 = vor.u32 1.1754944e-38, %v938
    %v940 = vsel %vm937, %v939, %v935
    %v941 = vmul.f32 1.0, %v940
    %v942 = vtanh.pop %v903
    %v943 = vsel %vm245, %v941, %v942
    %v944 = vmul.f32 %v922, %v852
    %946 = vrot.lane.b32.xlu0 %v943, 64
    %v947 = vpop.permute.xlu0 %946
    %v949 = vmul.f32 %v922, %v947
    %951 = vrot.lane.b32.xlu0 %v949, 64
    %v952 = vpop.permute.xlu0 %951
    %v954 = vadd.f32 %v944, %v952
    %v955 = vtanh.pop %v954
    %957 = vrot.lane.b32.xlu0 %v955, 64
    %v958 = vpop.permute.xlu0 %957
    %v960 = vmul.f32 %v943, %v958
    %v962 = vsel %vm246, %v960, 0
    %964 = vmatpush.msra.mxu0 0.0
    %965 = vmatpush.msra.mxu0 0.0
    %966 = vmatpush.msra.mxu0 0.0
    %967 = vmatpush.msra.mxu0 0.0
    %968 = vmatpush.msra.mxu0 0.0
    %969 = vmatpush.msra.mxu0 0.0
    %970 = vmatpush.msra.mxu0 0.0
    %971 = vmatpush.msra.mxu0 0.0
    %972 = vmatpush.msra.mxu0 %v241
    %973 = vmatpush.msra.mxu0 %v239
    %974 = vmatpush.msra.mxu0 %v237
    %975 = vmatpush.msra.mxu0 %v235
    %976 = vmatpush.msra.mxu0 %v233
    %977 = vmatpush.msra.mxu0 %v231
    %978 = vmatpush.msra.mxu0 %v229
    %979 = vmatpush.msra.mxu0 %v227
    %980 = vmatmul.f32.gmra.mxu0 %v962
    %v981 = vpop.f32.mrf.mxu0
    %v982 = vadd.f32 0.0, %v981
    %983 = vdwg.mxu0
    %984 = vmatpush.msra.mxu0 0.0
    %985 = vmatpush.msra.mxu0 0.0
    %986 = vmatpush.msra.mxu0 0.0
    %987 = vmatpush.msra.mxu0 0.0
    %988 = vmatpush.msra.mxu0 0.0
    %989 = vmatpush.msra.mxu0 0.0
    %990 = vmatpush.msra.mxu0 0.0
    %991 = vmatpush.msra.mxu0 0.0
    %992 = vmatpush.msra.mxu0 %v242
    %993 = vmatpush.msra.mxu0 %v240
    %994 = vmatpush.msra.mxu0 %v238
    %995 = vmatpush.msra.mxu0 %v236
    %996 = vmatpush.msra.mxu0 %v234
    %997 = vmatpush.msra.mxu0 %v232
    %998 = vmatpush.msra.mxu0 %v230
    %999 = vmatpush.msra.mxu0 %v228
    %1000 = vmatmul.f32.gmra.mxu0 %v962
    %v1001 = vpop.f32.mrf.mxu0
    %v1002 = vadd.f32 0.0, %v1001
    %1003 = vdwg.mxu0
    %v1004 = vadd.f32 %v196, %v982
    %v1005 = vadd.f32 %v225, %v1002
    %v1006 = vxor.u32 %v1004, 2147483648
    %v1007 = vmul.f32 %v1006, 1.442695
    %v1008 = vpow.pop %v1007
    %v1009 = vadd.f32 %v1008, 1.0
    %v1010 = vrcp.pop %v1009
    %v1011 = vmul.f32 %v1009, %v1010
    %v1012 = vsub.f32 1.0, %v1011
    %v1013 = vmul.f32 %v1010, %v1012
    %v1014 = vadd.f32 %v1010, %v1013
    %vm1015 = vweird.f32 %v1009
    %vm1016 = vweird.f32 %v1010
    %vm1017 = vmor %vm1015, %vm1016
    %v1018 = vsel %vm1017, %v1010, %v1014
    %v1019 = vand.u32 2147483647, %v1009
    %vm1020 = vcmp.eq.f32.partialorder %v1019, 8.507059e+37
    %v1021 = vand.u32 %v1009, 2147483648
    %v1022 = vor.u32 1.1754944e-38, %v1021
    %v1023 = vsel %vm1020, %v1022, %v1018
    %v1024 = vmul.f32 1.0, %v1023
    %v1025 = vxor.u32 %v1005, 2147483648
    %v1026 = vmul.f32 %v1025, 1.442695
    %v1027 = vpow.pop %v1026
    %v1028 = vadd.f32 %v1027, 1.0
    %v1029 = vrcp.pop %v1028
    %v1030 = vmul.f32 %v1028, %v1029
    %v1031 = vsub.f32 1.0, %v1030
    %v1032 = vmul.f32 %v1029, %v1031
    %v1033 = vadd.f32 %v1029, %v1032
    %vm1034 = vweird.f32 %v1028
    %vm1035 = vweird.f32 %v1029
    %vm1036 = vmor %vm1034, %vm1035
    %v1037 = vsel %vm1036, %v1029, %v1033
    %v1038 = vand.u32 2147483647, %v1028
    %vm1039 = vcmp.eq.f32.partialorder %v1038, 8.507059e+37
    %v1040 = vand.u32 %v1028, 2147483648
    %v1041 = vor.u32 1.1754944e-38, %v1040
    %v1042 = vsel %vm1039, %v1041, %v1037
    %v1043 = vmul.f32 1.0, %v1042
    %v1044 = vtanh.pop %v1005
    %v1045 = vsel %vm245, %v1043, %v1044
    %v1046 = vmul.f32 %v1024, %v954
    %1048 = vrot.lane.b32.xlu0 %v1045, 64
    %v1049 = vpop.permute.xlu0 %1048
    %v1051 = vmul.f32 %v1024, %v1049
    %1053 = vrot.lane.b32.xlu0 %v1051, 64
    %v1054 = vpop.permute.xlu0 %1053
    %v1056 = vadd.f32 %v1046, %v1054
    %v1057 = vtanh.pop %v1056
    %1059 = vrot.lane.b32.xlu0 %v1057, 64
    %v1060 = vpop.permute.xlu0 %1059
    %v1062 = vmul.f32 %v1045, %v1060
    %v1063 = vld [vmem:[#allocation4] sm:$0xff]
    %v1064 = vld [vmem:[#allocation4 + $0x8] sm:$0xff]
    %v1065 = vld [vmem:[#allocation4 + $0x10] sm:$0xff]
    %v1066 = vld [vmem:[#allocation4 + $0x18] sm:$0xff]
    %v1067 = vld [vmem:[#allocation4 + $0x20] sm:$0xff]
    %v1068 = vld [vmem:[#allocation4 + $0x28] sm:$0xff]
    %v1069 = vld [vmem:[#allocation4 + $0x30] sm:$0xff]
    %v1070 = vld [vmem:[#allocation4 + $0x38] sm:$0xff]
    %v1071 = vld [vmem:[%s5] sm:$0x1]
    %v1073 = vperm.slane %v1071, 0
    %v1076 = vsel %vm246, %v1062, 0
    %1078 = vmatpush.msra.mxu0 0.0
    %1079 = vmatpush.msra.mxu0 0.0
    %1080 = vmatpush.msra.mxu0 0.0
    %1081 = vmatpush.msra.mxu0 0.0
    %1082 = vmatpush.msra.mxu0 0.0
    %1083 = vmatpush.msra.mxu0 0.0
    %1084 = vmatpush.msra.mxu0 0.0
    %1085 = vmatpush.msra.mxu0 0.0
    %1086 = vmatpush.msra.mxu0 %v1070
    %1087 = vmatpush.msra.mxu0 %v1069
    %1088 = vmatpush.msra.mxu0 %v1068
    %1089 = vmatpush.msra.mxu0 %v1067
    %1090 = vmatpush.msra.mxu0 %v1066
    %1091 = vmatpush.msra.mxu0 %v1065
    %1092 = vmatpush.msra.mxu0 %v1064
    %1093 = vmatpush.msra.mxu0 %v1063
    %1094 = vmatmul.f32.gmra.mxu0 %v1076
    %v1095 = vpop.f32.mrf.mxu0
    %v1096 = vadd.f32 %v1073, %v1095
    %1097 = vdwg.mxu0
    %1098 = vst [vmem:[%s6] sm:$0xff] %v1096
    // Predicated region
    $region34: #{emotion_rnn_forward.1} parent=1 // pred_check
      _
    $region35: #{emotion_rnn_forward.1} parent=1 // pred_check_branch
      %1100 = sbr.rel (0) target = $region37
    $region36: #{emotion_rnn_forward.1} parent=1 // pred_region
      _
    $region37: #{emotion_rnn_forward.1} parent=1 // pred_fallthru
      _
    // Predicated region
    $region38: #{emotion_rnn_forward.1} parent=1 // pred_check
      _
    $region39: #{emotion_rnn_forward.1} parent=1 // pred_check_branch
      %1102 = sbr.rel (0) target = $region41
    $region40: #{emotion_rnn_forward.1} parent=1 // pred_region
      _
    $region41: #{emotion_rnn_forward.1} parent=1 // pred_fallthru
      _
    %1103 = vsyncpa [#allocation3], 1
    %1104 = vsyncpa [#allocation5], 1

</llo_original>
